<compile_context>
chip_gen: v7x
topology: tpu7x:2x2x1
jax: 0.10.0
libtpu: 0.0.40
codegen_flags: <defaults>
</compile_context>

<pallas_src>
import functools

import jax
import jax.numpy as jnp
from jax import lax
from jax.experimental import pallas as pl
from jax.experimental.pallas import tpu as pltpu


def _round_up(n: int, m: int) -> int:
    return ((n + m - 1) // m) * m


def _i32(v: int):
    """Python int -> int32 constant with two's-complement wrap (for hash consts)."""
    v &= 0xFFFFFFFF
    if v >= 0x80000000:
        v -= 1 << 32
    return jnp.int32(v)


def _rand_uniform_kernel(seed_ref, out_ref, *, u_min: float, u_max: float):
    """Fill out_ref (VMEM, f32) with Uniform(u_min, u_max) samples.

    Stateless PRNG: per-element counter (row-major index) mixed with the seed,
    run through the murmur3 32-bit finalizer. Only int32 VPU ops — lowers on
    TPU (Mosaic) and in interpret mode alike.
    """
    r, c = out_ref.shape
    rows = lax.broadcasted_iota(jnp.int32, (r, c), 0)
    cols = lax.broadcasted_iota(jnp.int32, (r, c), 1)
    idx = rows * jnp.int32(c) + cols

    seed = seed_ref[0]
    h = idx ^ (seed * _i32(0x9E3779B9))
    # murmur3 fmix32 (int32 mults wrap like uint32 — same bit pattern).
    h = h ^ lax.shift_right_logical(h, 16)
    h = h * _i32(0x85EBCA6B)
    h = h ^ lax.shift_right_logical(h, 13)
    h = h * _i32(0xC2B2AE35)
    h = h ^ lax.shift_right_logical(h, 16)

    # Keep 23 low bits -> non-negative int exactly representable in f32,
    # scale into [0, 1).
    mant = h & jnp.int32(0x7FFFFF)
    u01 = mant.astype(jnp.float32) * jnp.float32(1.0 / (1 << 23))
    out_ref[...] = jnp.float32(u_min) + jnp.float32(u_max - u_min) * u01


def sample_uniform_pallas(shape, u_min, u_max, seed):
    """One-shot uniform sampling via a gridless Pallas kernel."""
    r, c = shape
    # Lane-dense padded block: rows -> multiple of 8 (sublanes),
    # cols -> multiple of 128 (lanes). Slice once afterwards.
    rp = _round_up(max(int(r), 1), 8)
    cp = _round_up(max(int(c), 1), 128)
    kern = functools.partial(
        _rand_uniform_kernel, u_min=float(u_min), u_max=float(u_max)
    )
    padded = pl.pallas_call(
        kern,
        out_shape=jax.ShapeDtypeStruct((rp, cp), jnp.float32),
        # Gridless call: no pipeline prologue/epilogue, single-buffered.
        in_specs=[pl.BlockSpec(memory_space=pltpu.MemorySpace.SMEM)],
        out_specs=pl.BlockSpec(memory_space=pltpu.MemorySpace.VMEM),
    )(jnp.asarray([seed], dtype=jnp.int32))
    # One-time slice at init; forward() never touches this path again.
    return padded[:r, :c]


class RandConstController:
    """Constant controller: forward(t, x) -> u0 (Pallas TPU implementation)."""

    def __init__(self, shape=(1, 1), u_min=-1.0, u_max=1.0, seed=0):
        # u0 ~ Uniform(u_min, u_max), sampled once on-device by the Pallas kernel.
        self.u0 = sample_uniform_pallas(shape, u_min, u_max, seed)

    def forward(self, t, x):
        # Constant controller: t and x are intentionally ignored.
        # Zero-copy hot path — return the resident device array directly
        # (no identity kernel, no HBM traffic, no launch overhead).
        del t, x
        return self.u0

    __call__ = forward


if __name__ == "__main__":
    key = jax.random.PRNGKey(0)

    # Small shapes consistent with the module: a (1, 1) control, a typical
    # dynamics state x of shape (batch=2, state_dim=4), scalar t.
    ctrl = RandConstController(shape=(1, 1), u_min=-1.0, u_max=1.0, seed=0)
    jax.block_until_ready(ctrl.u0)  # the Pallas sampling kernel ran here

    t = jnp.float32(0.0)
    x = jax.random.normal(key, (2, 4), dtype=jnp.float32)

    u = ctrl(t, x)
    jax.block_until_ready(u)

    # Correctness: constant output, independent of t and x, within bounds.
    assert u.shape == (1, 1)
    assert u.dtype == jnp.float32
    assert u is ctrl.u0  # zero-copy hot path (same object, like PyTorch)
    assert bool(jnp.all((u >= -1.0) & (u <= 1.0)))

    u2 = ctrl(jnp.float32(3.0), jnp.zeros((5, 7), dtype=jnp.float32))
    assert bool(jnp.all(u2 == u))  # ignores t and x

    # A larger control shape exercises the same kernel (still one gridless call).
    ctrl2 = RandConstController(shape=(4, 8), u_min=-2.0, u_max=3.0, seed=7)
    jax.block_until_ready(ctrl2.u0)
    assert ctrl2.u0.shape == (4, 8)
    assert bool(jnp.all((ctrl2.u0 >= -2.0) & (ctrl2.u0 <= 3.0)))

    print("KERNEL_OK")
</pallas_src>

<mosaic_0001>
module attributes {stable_mosaic.version = 11 : i64} {
  func.func @_rand_uniform_kernel(%arg0: memref<1xi32, #tpu.memory_space<smem>>, %arg1: memref<8x128xf32, #tpu.memory_space<vmem>>) attributes {dimension_semantics = [], scalar_prefetch = 0 : i64, scratch_operands = 0 : i64, tpu.core_type = #tpu.core_type<tc>} {
    %0 = tpu.iota {dimensions = array<i32: 0>} : vector<8x128xi32>
    %1 = tpu.iota {dimensions = array<i32: 1>} : vector<8x128xi32>
    %c128_i32 = arith.constant 128 : i32
    %2 = vector.broadcast %c128_i32 : i32 to vector<8x128xi32>
    %3 = arith.muli %0, %2 : vector<8x128xi32>
    %4 = arith.addi %3, %1 : vector<8x128xi32>
    %c0 = arith.constant 0 : index
    %5 = memref.load %arg0[%c0] : memref<1xi32, #tpu.memory_space<smem>>
    %c-1640531527_i32 = arith.constant -1640531527 : i32
    %6 = arith.muli %5, %c-1640531527_i32 : i32
    %7 = vector.broadcast %6 : i32 to vector<8x128xi32>
    %8 = arith.xori %4, %7 : vector<8x128xi32>
    %c16_i32 = arith.constant 16 : i32
    %9 = vector.broadcast %c16_i32 : i32 to vector<8x128xi32>
    %10 = arith.shrui %8, %9 : vector<8x128xi32>
    %11 = arith.xori %8, %10 : vector<8x128xi32>
    %c-2048144789_i32 = arith.constant -2048144789 : i32
    %12 = vector.broadcast %c-2048144789_i32 : i32 to vector<8x128xi32>
    %13 = arith.muli %11, %12 : vector<8x128xi32>
    %c13_i32 = arith.constant 13 : i32
    %14 = vector.broadcast %c13_i32 : i32 to vector<8x128xi32>
    %15 = arith.shrui %13, %14 : vector<8x128xi32>
    %16 = arith.xori %13, %15 : vector<8x128xi32>
    %c-1028477387_i32 = arith.constant -1028477387 : i32
    %17 = vector.broadcast %c-1028477387_i32 : i32 to vector<8x128xi32>
    %18 = arith.muli %16, %17 : vector<8x128xi32>
    %c16_i32_0 = arith.constant 16 : i32
    %19 = vector.broadcast %c16_i32_0 : i32 to vector<8x128xi32>
    %20 = arith.shrui %18, %19 : vector<8x128xi32>
    %21 = arith.xori %18, %20 : vector<8x128xi32>
    %c8388607_i32 = arith.constant 8388607 : i32
    %22 = vector.broadcast %c8388607_i32 : i32 to vector<8x128xi32>
    %23 = arith.andi %21, %22 : vector<8x128xi32>
    %24 = arith.sitofp %23 : vector<8x128xi32> to vector<8x128xf32>
    %cst = arith.constant 1.1920929E-7 : f32
    %25 = vector.broadcast %cst : f32 to vector<8x128xf32>
    %26 = arith.mulf %24, %25 : vector<8x128xf32>
    %cst_1 = arith.constant 2.000000e+00 : f32
    %27 = vector.broadcast %cst_1 : f32 to vector<8x128xf32>
    %28 = arith.mulf %27, %26 : vector<8x128xf32>
    %cst_2 = arith.constant -1.000000e+00 : f32
    %29 = vector.broadcast %cst_2 : f32 to vector<8x128xf32>
    %30 = arith.addf %29, %28 : vector<8x128xf32>
    %c0_3 = arith.constant 0 : index
    %c0_4 = arith.constant 0 : index
    %31 = vector.load %arg1[%c0_3, %c0_4] : memref<8x128xf32, #tpu.memory_space<vmem>>, vector<8x128xf32>
    tpu.vector_store %arg1[%c0_3, %c0_4], %30 {strides = array<i32>} : memref<8x128xf32, #tpu.memory_space<vmem>>, vector<8x128xf32>,
    return
  }
}

</mosaic_0001>

<llo_original>
// kernel: tpu_custom_call.1
$region0: #{tpu_custom_call.1}
  #allocation0 [shape = 'u32[]', space=smem, size = 0x4, offset = 0x4, fixed_abs, tag = 'smem constant byte address 0x4 - core index']
  #allocation1 [shape = 'u32[144,128]{1,0:T(1,128)}', space=vmem, size = 0x12000, scoped, tag = 'internal scratch']
  #allocation2 [shape = 's32[1]{0:T(128)S(6)}', space=smem, size = 0x200, scoped, tag = 'scoped memory for tpu_custom_call.1']
  %s0 = inlined_call_operand.<no memory space> [shape: s32[1], index: 0, kind: input, shape index: {}]
  %s1 = inlined_call_operand.hbm [shape: f32[8,128], index: 1, kind: output, shape index: {}]
  %s2 = sld [smem:[#allocation0]]
  $region14: #{tpu_custom_call.1} parent=0
    _
  %s4 = ssub.s32 1, %s2
  %s5 = scalar_select 0, %s4, %s2
  %6 = sst [smem:[#allocation2]] %s0
  $region1: #{tpu_custom_call.1} parent=0
    #allocation3 [shape = 'u8[4096]{0}', space=vmem, size = 0x1000, scoped, tag = 'output window, operand 0, single buffered']
    #allocation4 [shape = 's32[1]{0}', space=sflag, size = 0x4, scoped, tag = 'scoped memory for tpu_custom_call.1']
    %7 = vsyncpa [#allocation4], 0
    // Predicated region
    $region2: #{tpu_custom_call.1} parent=1 // pred_check
      _
    $region3: #{tpu_custom_call.1} parent=1 // pred_check_branch
      %9 = sbr.rel (0) target = $region5
    $region4: #{tpu_custom_call.1} parent=1 // pred_region
      _
    $region5: #{tpu_custom_call.1} parent=1 // pred_fallthru
      _
    %v10 = vlaneseq
    %v11 = vshrl.u32 %v10, 7
    %v12 = vlaneseq
    %v13 = vand.u32 %v12, 127
    %v14 = vmul.u32 %v11, 128
    %v15 = vadd.s32 %v14, %v13
    %s16 = sld [smem:[#allocation2]]
    %s17 = smul.u32 %s16, 2654435769
    %v18 = vstv %s17
    %v19 = vxor.u32 %v15, %v18
    %v20 = vshrl.u32 %v19, 16
    %v21 = vxor.u32 %v19, %v20
    %v22 = vmul.u32 %v21, 2246822507
    %v23 = vshrl.u32 %v22, 13
    %v24 = vxor.u32 %v22, %v23
    %v25 = vmul.u32 %v24, 3266489909
    %v26 = vshrl.u32 %v25, 16
    %v27 = vxor.u32 %v25, %v26
    %v28 = vand.u32 %v27, 8388607
    %v29 = vcvt.s32.f32 %v28
    %v30 = vmul.f32 %v29, 1.1920929e-07
    %v31 = vmul.f32 %v30, 2.0
    %v32 = vadd.f32 %v31, -1.0
    %33 = vst [vmem:[#allocation3] sm:$0xff] %v32
    // Predicated region
    $region6: #{tpu_custom_call.1} parent=1 // pred_check
      _
    $region7: #{tpu_custom_call.1} parent=1 // pred_check_branch
      %35 = sbr.rel (0) target = $region9
    $region8: #{tpu_custom_call.1} parent=1 // pred_region
      %s37 = ssub.s32 128, 128
      %38 = vsyncadd [#allocation4], %s37
      %s40 = sshll.u32 [#allocation3], 4
      %s41 = int_to_ptr.vmem [resolvable:$true] %s40
      %43 = dma.vmem_to_hbm [thread:$0]  %s41, 128, %s1, [#allocation4]
    $region9: #{tpu_custom_call.1} parent=1 // pred_fallthru
      _
    // Predicated region
    $region10: #{tpu_custom_call.1} parent=1 // pred_check
      _
    $region11: #{tpu_custom_call.1} parent=1 // pred_check_branch
      %45 = sbr.rel (0) target = $region13
    $region12: #{tpu_custom_call.1} parent=1 // pred_region
      %46 = dma.done [#allocation4], 128
    $region13: #{tpu_custom_call.1} parent=1 // pred_fallthru
      _
    %47 = vsyncpa [#allocation4], 1

</llo_original>
